<compile_context>
chip_gen: v7x
topology: tpu7x:2x2x1
jax: 0.10.0
libtpu: 0.0.40
codegen_flags: <defaults>
</compile_context>

<pallas_src>
import jax
import jax.numpy as jnp
from jax.experimental import pallas as pl
from jax.experimental.pallas import tpu as pltpu


# --------------------------------------------------------------------------
# Kernel bodies (elementwise; VPU only, no upcast).
# --------------------------------------------------------------------------
def _h_sigmoid_kernel(x_ref, o_ref):
    x = x_ref[...]
    # relu6(x + 3) / 6  ==  clip(x + 3, 0, 6) * (1/6)
    o_ref[...] = (jnp.clip(x + 3.0, 0.0, 6.0) * (1.0 / 6.0)).astype(o_ref.dtype)


def _h_swish_kernel(x_ref, o_ref):
    x = x_ref[...]
    o_ref[...] = (x * jnp.clip(x + 3.0, 0.0, 6.0) * (1.0 / 6.0)).astype(o_ref.dtype)


# --------------------------------------------------------------------------
# Layout / tiling constants.
# --------------------------------------------------------------------------
_LANE = 128
# Above this the call is gridded with an even grid of >= 2 "parallel" steps so
# both v7x TensorCores stream against HBM and in/out DMAs overlap.
_GRIDLESS_MAX_BYTES = 512 * 1024
# Block-size window for the gridded path. 4 MiB blocks with a 3-deep input +
# 2-deep output pipeline fit comfortably in a 32 MiB scoped-VMEM budget, which
# is safe on v5e/v6e (128 MiB VMEM) and v7x (64 MiB VMEM per TC).
_MIN_BLOCK_BYTES = 512 * 1024
_DEFAULT_BLOCK_BYTES = 4 * 1024 * 1024
# Ragged (no factor of 128) tensors this small run as one full-extent block.
_RAGGED_WHOLE_MAX_BYTES = 4 * 1024 * 1024


def _choose_width(n):
    """Widest lane-dense width (multiple of 128) that divides n, else None."""
    for width in (16 * _LANE, 8 * _LANE, 4 * _LANE, 2 * _LANE, _LANE):
        if n % width == 0:
            return width
    return None


def _make_in_spec(block_shape, index_map):
    """Input BlockSpec with a 3-deep pipeline when the API supports it."""
    if hasattr(pl, "Buffered"):
        try:
            # At v7x's ~3.2 TB/s a block streams in a few microseconds, close
            # to the per-step overhead; a 3-deep input buffer hides DMA issue
            # latency. Costs one extra block of VMEM (budgeted below).
            return pl.BlockSpec(block_shape, index_map,
                                pipeline_mode=pl.Buffered(3))
        except TypeError:
            pass
    return pl.BlockSpec(block_shape, index_map)


def _is_tracer(x):
    tracer_t = getattr(jax.core, "Tracer", None)
    return tracer_t is not None and isinstance(x, tracer_t)


def _ragged_call(kernel, x):
    """Fallback for element counts with no factor of 128.

    Runs directly on the original array: full-extent trailing dims are always
    a legal block shape, so there is no pad / slice / reshape copy at all.
    These shapes are tiny in MobileNetV3 (7x7 tails, (N, 1000) logits).
    No input_output_aliases here: x may be the caller's own array and must not
    be donated out from under them.
    """
    dtype = x.dtype
    nbytes = int(x.size) * jnp.dtype(dtype).itemsize
    if x.ndim < 2:
        x2 = x.reshape(1, -1)
        out = pl.pallas_call(
            kernel, out_shape=jax.ShapeDtypeStruct(x2.shape, dtype))(x2)
        return out.reshape(x.shape)
    if nbytes <= _RAGGED_WHOLE_MAX_BYTES or x.ndim == 2:
        # TODO(synk): a multi-MiB ragged 2-D tensor would want row blocking;
        # it does not occur in MobileNetV3.
        return pl.pallas_call(
            kernel,
            out_shape=jax.ShapeDtypeStruct(x.shape, dtype),
            compiler_params=pltpu.CompilerParams(
                vmem_limit_bytes=int(min(max(4 * nbytes, 16 * 1024 * 1024),
                                         32 * 1024 * 1024))),
        )(x)
    # Large ragged (rare): stream one leading-dim slice per grid step; the
    # trailing two dims stay at full extent (always a legal block shape).
    grid = tuple(int(d) for d in x.shape[:-2])
    block_shape = (1,) * (x.ndim - 2) + tuple(x.shape[-2:])

    def index_map(*g):
        return g + (0, 0)

    spec = pl.BlockSpec(block_shape, index_map)
    return pl.pallas_call(
        kernel,
        out_shape=jax.ShapeDtypeStruct(x.shape, dtype),
        grid=grid,
        in_specs=[spec],
        out_specs=spec,
        compiler_params=pltpu.CompilerParams(
            dimension_semantics=("parallel",) * len(grid)),
    )(x)


def _elementwise_call(kernel, x, *, target_block_bytes=_DEFAULT_BLOCK_BYTES,
                      donate_input=None):
    orig_shape = x.shape
    dtype = x.dtype
    itemsize = jnp.dtype(dtype).itemsize
    # 8 sublanes of 32-bit; sub-32-bit dtypes pack along sublanes (bf16 -> 16).
    sublane_mult = 8 * max(1, 4 // itemsize)

    n = int(x.size)
    if n == 0:
        return x

    width = _choose_width(n)
    if width is None:
        return _ragged_call(kernel, x)

    rows = n // width
    x2d = x.reshape(rows, width)
    slab_bytes = n * itemsize

    # Apply in place (input_output_aliases={0: 0}, no fresh HBM output
    # allocation) only when (a) the kernel input is a freshly materialized
    # temp, never the caller's own array, and (b) we are inside a surrounding
    # jit trace where x is typically a producer's intermediate so XLA can
    # alias its buffer directly. For standalone eager calls XLA would have to
    # insert a defensive copy to honor the alias, which *adds* HBM traffic.
    if donate_input is None:
        use_alias = _is_tracer(x2d)
    else:
        use_alias = bool(donate_input)
    io_aliases = {0: 0} if (use_alias and x2d is not x) else {}

    if slab_bytes <= min(_GRIDLESS_MAX_BYTES, target_block_bytes):
        # Single full-extent block: no pipeline overhead for small activations.
        out2d = pl.pallas_call(
            kernel,
            out_shape=jax.ShapeDtypeStruct((rows, width), dtype),
            input_output_aliases=io_aliases,
        )(x2d)
        return out2d.reshape(orig_shape)

    # Gridded, auto-pipelined path: even grid of >= 2 lane-dense blocks in
    # roughly [512 KiB, 4 MiB], so input DMAs overlap output writeback and
    # (on v7x) both TensorCores get an equal share of the stream.
    min_block = min(_MIN_BLOCK_BYTES, target_block_bytes)
    desired_block = max(min_block, min(slab_bytes // 8, target_block_bytes))
    num_blocks = max(2, pl.cdiv(slab_bytes, desired_block))
    if num_blocks % 2:
        num_blocks += 1
    tr = pl.cdiv(rows, num_blocks)
    tr = max(sublane_mult, pl.cdiv(tr, sublane_mult) * sublane_mult)
    grid_steps = pl.cdiv(rows, tr)      # last block may be partial: reads of
    #                                     out-of-bounds rows are garbage and
    #                                     their stores are masked (elementwise
    #                                     -> never fed back into live results).

    block_bytes = tr * width * itemsize
    # 3x input + 2x output blocks + headroom. The explicit limit keeps this
    # above v5e's 16 MiB default scoped VMEM and v7x-safe (<= 32 MiB).
    vmem_limit = int(min(max(6 * block_bytes, 16 * 1024 * 1024),
                         32 * 1024 * 1024))

    out2d = pl.pallas_call(
        kernel,
        out_shape=jax.ShapeDtypeStruct((rows, width), dtype),
        grid=(grid_steps,),
        in_specs=[_make_in_spec((tr, width), lambda i: (i, 0))],
        out_specs=pl.BlockSpec((tr, width), lambda i: (i, 0)),
        input_output_aliases=io_aliases,
        compiler_params=pltpu.CompilerParams(
            dimension_semantics=("parallel",),
            vmem_limit_bytes=vmem_limit,
        ),
    )(x2d)
    return out2d.reshape(orig_shape)


def h_sigmoid(x, *, target_block_bytes=_DEFAULT_BLOCK_BYTES, donate_input=None):
    """Hard-sigmoid: relu6(x + 3) / 6 (MobileNetV3 h_sigmoid.forward)."""
    return _elementwise_call(_h_sigmoid_kernel, x,
                             target_block_bytes=target_block_bytes,
                             donate_input=donate_input)


def h_swish(x, *, target_block_bytes=_DEFAULT_BLOCK_BYTES, donate_input=None):
    """Hard-swish: x * relu6(x + 3) / 6 (MobileNetV3 h_swish.forward)."""
    return _elementwise_call(_h_swish_kernel, x,
                             target_block_bytes=target_block_bytes,
                             donate_input=donate_input)


if __name__ == "__main__":
    key = jax.random.PRNGKey(0)
    k1, k2, k3, k4, k5 = jax.random.split(key, 5)

    def ref_sigmoid(v):
        return jnp.clip(v + 3.0, 0.0, 6.0) / 6.0

    def ref_swish(v):
        return v * jnp.clip(v + 3.0, 0.0, 6.0) / 6.0

    # 1) Small NCHW activation (gridless lane-dense path).
    x = jax.random.normal(k1, (2, 4, 16, 16), dtype=jnp.float32) * 4.0
    ref_s, ref_w = ref_sigmoid(x), ref_swish(x)
    out_s = jax.block_until_ready(h_sigmoid(x))
    assert out_s.shape == x.shape and out_s.dtype == x.dtype
    assert jnp.allclose(out_s, ref_s, atol=1e-6), "h_sigmoid mismatch"
    out_w = jax.block_until_ready(h_swish(x))
    assert out_w.shape == x.shape and out_w.dtype == x.dtype
    assert jnp.allclose(out_w, ref_w, atol=1e-6), "h_swish mismatch"

    # 2) Default gridded path (>512 KiB slab -> even grid of >= 2 steps).
    xg = jax.random.normal(k2, (4, 64, 32, 32), dtype=jnp.float32)
    out_g = jax.block_until_ready(h_swish(xg))
    assert jnp.allclose(out_g, ref_swish(xg), atol=1e-6), "gridded h_swish mismatch"

    # 3) Forced tiny blocks -> partial (masked) last grid block.
    xp = jax.random.normal(k3, (2, 5, 24, 128), dtype=jnp.float32)
    out_p = jax.block_until_ready(h_sigmoid(xp, target_block_bytes=16 * 1024))
    assert jnp.allclose(out_p, ref_sigmoid(xp), atol=1e-6), "partial-block mismatch"

    # 4) Ragged element count (no factor of 128) -> direct full-extent block,
    #    no pad / slice / reshape copies.
    xr = jax.random.normal(k4, (1, 3, 7, 7), dtype=jnp.float32)
    out_r = jax.block_until_ready(h_sigmoid(xr))
    assert jnp.allclose(out_r, ref_sigmoid(xr), atol=1e-6), "ragged h_sigmoid mismatch"

    # 5) bf16 (sublane packing of 16), no upcast in the kernel.
    xb = (jax.random.normal(k5, (2, 8, 16, 16), dtype=jnp.float32) * 4.0
          ).astype(jnp.bfloat16)
    out_b = jax.block_until_ready(h_swish(xb))
    assert out_b.dtype == jnp.bfloat16
    assert jnp.allclose(out_b.astype(jnp.float32),
                        ref_swish(xb.astype(jnp.float32)),
                        atol=3e-2, rtol=3e-2), "bf16 h_swish mismatch"

    # 6) Jitted composite: the activation input is an intermediate, so the
    #    in-place aliasing path (input_output_aliases={0: 0}) is exercised.
    fused = jax.jit(lambda v: h_swish(v + 1.0))
    out_f = jax.block_until_ready(fused(xg))
    assert jnp.allclose(out_f, ref_swish(xg + 1.0), atol=1e-6), "jitted/aliased mismatch"

    print("KERNEL_OK")
</pallas_src>

<mosaic_0001>
module attributes {stable_mosaic.version = 11 : i64} {
  func.func @_h_sigmoid_kernel(%arg0: memref<1x2048xf32, #tpu.memory_space<vmem>>, %arg1: memref<1x2048xf32, #tpu.memory_space<vmem>>) attributes {dimension_semantics = [], scalar_prefetch = 0 : i64, scratch_operands = 0 : i64, tpu.core_type = #tpu.core_type<tc>} {
    %c0 = arith.constant 0 : index
    %c0_0 = arith.constant 0 : index
    %0 = vector.load %arg0[%c0, %c0_0] : memref<1x2048xf32, #tpu.memory_space<vmem>>, vector<1x2048xf32>
    %cst = arith.constant 3.000000e+00 : f32
    %1 = vector.broadcast %cst : f32 to vector<1x2048xf32>
    %2 = arith.addf %0, %1 : vector<1x2048xf32>
    %cst_1 = arith.constant 0.000000e+00 : f32
    %cst_2 = arith.constant 6.000000e+00 : f32
    %3 = vector.broadcast %cst_1 : f32 to vector<1x2048xf32>
    %4 = arith.maximumf %3, %2 : vector<1x2048xf32>
    %5 = vector.broadcast %cst_2 : f32 to vector<1x2048xf32>
    %6 = arith.minimumf %5, %4 : vector<1x2048xf32>
    %cst_3 = arith.constant 0.166666672 : f32
    %7 = vector.broadcast %cst_3 : f32 to vector<1x2048xf32>
    %8 = arith.mulf %6, %7 : vector<1x2048xf32>
    %c0_4 = arith.constant 0 : index
    %c0_5 = arith.constant 0 : index
    %9 = vector.load %arg1[%c0_4, %c0_5] : memref<1x2048xf32, #tpu.memory_space<vmem>>, vector<1x2048xf32>
    tpu.vector_store %arg1[%c0_4, %c0_5], %8 {strides = array<i32>} : memref<1x2048xf32, #tpu.memory_space<vmem>>, vector<1x2048xf32>,
    return
  }
}

</mosaic_0001>

<llo_original>
// kernel: tpu_custom_call.1
$region0: #{tpu_custom_call.1}
  #allocation0 [shape = 'u32[]', space=smem, size = 0x4, offset = 0x4, fixed_abs, tag = 'smem constant byte address 0x4 - core index']
  #allocation1 [shape = 'u32[144,128]{1,0:T(1,128)}', space=vmem, size = 0x12000, scoped, tag = 'internal scratch']
  %s0 = inlined_call_operand.hbm [shape: f32[1,2048], index: 0, kind: input, shape index: {}]
  %s1 = inlined_call_operand.hbm [shape: f32[1,2048], index: 1, kind: output, shape index: {}]
  %s2 = sld [smem:[#allocation0]]
  $region18: #{tpu_custom_call.1} parent=0
    _
  %s4 = ssub.s32 1, %s2
  %s5 = scalar_select 0, %s4, %s2
  $region1: #{tpu_custom_call.1} parent=0
    #allocation2 [shape = 'u8[8192]{0}', space=vmem, size = 0x2000, scoped, tag = 'input window, operand 0, single buffered']
    #allocation3 [shape = 's32[1]{0}', space=sflag, size = 0x4, scoped, tag = 'scoped memory for tpu_custom_call.1']
    #allocation4 [shape = 's32[1]{0}', space=sflag, size = 0x4, scoped, tag = 'scoped memory for tpu_custom_call.1']
    #allocation5 [shape = 'u8[8192]{0}', space=vmem, size = 0x2000, scoped, tag = 'output window, operand 0, single buffered']
    %6 = vsyncpa [#allocation3], 0
    %7 = vsyncpa [#allocation4], 0
    // Predicated region
    $region2: #{tpu_custom_call.1} parent=1 // pred_check
      _
    $region3: #{tpu_custom_call.1} parent=1 // pred_check_branch
      %9 = sbr.rel (0) target = $region5
    $region4: #{tpu_custom_call.1} parent=1 // pred_region
      %s11 = ssub.s32 256, 256
      %12 = vsyncadd [#allocation3], %s11
      %s14 = sshll.u32 [#allocation2], 4
      %s15 = int_to_ptr.vmem [resolvable:$true] %s14
      %17 = dma.hbm_to_vmem [thread:$0]  %s0, 256, %s15, [#allocation3]
    $region5: #{tpu_custom_call.1} parent=1 // pred_fallthru
      _
    // Predicated region
    $region6: #{tpu_custom_call.1} parent=1 // pred_check
      _
    $region7: #{tpu_custom_call.1} parent=1 // pred_check_branch
      %19 = sbr.rel (0) target = $region9
    $region8: #{tpu_custom_call.1} parent=1 // pred_region
      %20 = dma.done [#allocation3], 256
    $region9: #{tpu_custom_call.1} parent=1 // pred_fallthru
      _
    %v21 = vld [vmem:[#allocation2] sm:$0xff]
    %v22 = vld [vmem:[#allocation2 + $0x8] sm:$0xff]
    %v23 = vadd.f32 %v21, 3.0
    %v24 = vadd.f32 %v22, 3.0
    %v25 = vmax.f32 %v23, 0.0
    %v26 = vmax.f32 %v24, 0.0
    %v27 = vmin.f32 %v25, 6.0
    %v28 = vmin.f32 %v26, 6.0
    %v29 = vmul.f32 %v27, 0.16666667
    %v30 = vmul.f32 %v28, 0.16666667
    %31 = vst [vmem:[#allocation5] sm:$0xff] %v29
    %32 = vst [vmem:[#allocation5 + $0x8] sm:$0xff] %v30
    // Predicated region
    $region10: #{tpu_custom_call.1} parent=1 // pred_check
      _
    $region11: #{tpu_custom_call.1} parent=1 // pred_check_branch
      %34 = sbr.rel (0) target = $region13
    $region12: #{tpu_custom_call.1} parent=1 // pred_region
      %s36 = ssub.s32 256, 256
      %37 = vsyncadd [#allocation4], %s36
      %s39 = sshll.u32 [#allocation5], 4
      %s40 = int_to_ptr.vmem [resolvable:$true] %s39
      %42 = dma.vmem_to_hbm [thread:$0]  %s40, 256, %s1, [#allocation4]
    $region13: #{tpu_custom_call.1} parent=1 // pred_fallthru
      _
    // Predicated region
    $region14: #{tpu_custom_call.1} parent=1 // pred_check
      _
    $region15: #{tpu_custom_call.1} parent=1 // pred_check_branch
      %44 = sbr.rel (0) target = $region17
    $region16: #{tpu_custom_call.1} parent=1 // pred_region
      %45 = dma.done [#allocation4], 256
    $region17: #{tpu_custom_call.1} parent=1 // pred_fallthru
      _
    %46 = vsyncpa [#allocation3], 1
    %47 = vsyncpa [#allocation4], 1

</llo_original>
